<compile_context>
chip_gen: v6e
topology: v6e:2x2x1
jax: 0.10.0
libtpu: 0.0.40
codegen_flags: <defaults>
</compile_context>

<pallas_src>
import functools

import numpy as np

import jax
import jax.numpy as jnp
from jax.experimental import pallas as pl
from jax.experimental.pallas import tpu as pltpu


C1 = 11               # channels after f0 / inside the BasicBlock
C2 = 19               # channels after f2
WPAD = 28 * C1        # lane width of the (width-padded) feature slabs = 308
N_IMG = 8             # images per grid step (tunable: 4 on v5e, 8/16 on v6e/v7x)
RPI = 28              # slab rows per image (26 valid conv rows + 2 zero pad rows)
ROWS = N_IMG * RPI    # 224 rows per grid step
NHEAD = 26 * 10       # folded-head output lanes (feature row ih x 10 logits)
EPS = 1e-5


# ---------------------------------------------------------------------------
# Fused Pallas kernel: N_IMG images per grid step, everything stays in VMEM.
# ---------------------------------------------------------------------------
def _fused_kernel(roll_sign,
                  x_ref, t0_ref, b0_ref, rowm_ref,
                  t1_ref, s1_ref, sh1_ref,
                  t2_ref, s2_ref, sh2_ref,
                  mcat_ref, maskh_ref, ffold_ref, ssum_ref,
                  o_ref):
    f32, bf16 = jnp.float32, jnp.bfloat16

    def shift_rows(a, k):
        # result[i, :] = a[i - k, :] (cyclic roll on the sublane axis).
        # Wrapped-in rows are either the all-zero pad rows 26/27 of the
        # neighbouring image (exactly the zero padding the convs need) or land
        # on output rows 26/27, which are re-zeroed by the row mask.
        return pltpu.roll(a, (roll_sign * k) % ROWS, axis=0)

    def mm(a, b):
        return jnp.dot(a, b, preferred_element_type=f32)

    rowm = rowm_ref[...]                                     # (ROWS, 1) 0/1 f32

    # ---- f0: Conv2d(1 -> 11, 3x3, valid) + bias ---------------------------
    x = x_ref[...]                                           # (ROWS, 28) f32
    acc = (mm(x.astype(bf16), t0_ref[0])
           + mm(shift_rows(x, -1).astype(bf16), t0_ref[1])
           + mm(shift_rows(x, -2).astype(bf16), t0_ref[2]))
    core0 = (acc + b0_ref[...]) * rowm                       # (ROWS, 308) f32
    core0_b = core0.astype(bf16)                             # bf16 residual copy

    # ---- BasicBlock conv1 (3x3, pad=1) + BN1 + ReLU -----------------------
    acc = (mm(core0_b, t1_ref[1])                            # identity height tap
           + mm(shift_rows(core0, 1).astype(bf16), t1_ref[0])
           + mm(shift_rows(core0, -1).astype(bf16), t1_ref[2]))
    core1 = jnp.maximum(acc * s1_ref[...] + sh1_ref[...], 0.0) * rowm
    core1_b = core1.astype(bf16)

    # ---- BasicBlock conv2 (3x3, pad=1) + BN2 + identity + ReLU ------------
    acc = (mm(core1_b, t2_ref[1])
           + mm(shift_rows(core1, 1).astype(bf16), t2_ref[0])
           + mm(shift_rows(core1, -1).astype(bf16), t2_ref[2]))
    core2 = jnp.maximum(acc * s2_ref[...] + sh2_ref[...]
                        + core0_b.astype(f32), 0.0) * rowm
    core2_b = core2.astype(bf16)

    # ---- folded f2 (17x17 conv) o f3 o f4 head + LogSoftmax ---------------
    # pbig[r, ih*10+n] = <core2 row r, head matrix for feature row ih>
    pbig = mm(core2_b, mcat_ref[...])                        # (ROWS, 260) f32
    # keep only the ih == (r mod 28) block of each row, fold lanes to 10 logits
    q = mm((pbig * maskh_ref[...]).astype(bf16), ffold_ref[...])   # (ROWS, 10)
    logits = mm(ssum_ref[...], q.astype(bf16))               # (N_IMG, 10) f32

    m = jnp.max(logits, axis=1, keepdims=True)
    lse = m + jnp.log(jnp.sum(jnp.exp(logits - m), axis=1, keepdims=True))
    o_ref[...] = logits - lse


# ---------------------------------------------------------------------------
# Host-side (one-time) parameter preparation.
# ---------------------------------------------------------------------------
def _chan_row(vec):
    """(11,) -> (1, 308) replicated per interior width column, zero at pads."""
    row = np.zeros((1, WPAD), np.float32)
    v = np.asarray(vec, np.float32)
    for ow in range(26):
        row[0, (ow + 1) * C1:(ow + 2) * C1] = v
    return row


def _toeplitz_f0(w0):
    """(11,1,3,3) -> (3, 28, 308): width taps of the valid 3x3 conv on 28x28."""
    w0 = np.asarray(w0, np.float32)
    T = np.zeros((3, 28, WPAD), np.float32)
    for kh in range(3):
        for kw in range(3):
            for ow in range(26):
                T[kh, ow + kw, (ow + 1) * C1:(ow + 2) * C1] = w0[:, 0, kh, kw]
    return T


def _toeplitz_3x3(w):
    """(11,11,3,3) -> (3, 308, 308): width taps of the pad=1 3x3 conv."""
    w = np.asarray(w, np.float32)
    T = np.zeros((3, WPAD, WPAD), np.float32)
    for kh in range(3):
        for kw in range(3):
            blk = w[:, :, kh, kw].T          # (ci, co)
            for ow in range(26):
                iwp = ow + kw                # padded input width index
                T[kh, iwp * C1:(iwp + 1) * C1,
                  (ow + 1) * C1:(ow + 2) * C1] = blk
    return T


def _fold_head(f2_w, f3_w, f4_w):
    """Fold Conv2d(11->19,17x17,valid) o Linear(1900,32) o Linear(32,10) into a
    single (308, 260) matrix: column block ih*10..ih*10+9 maps feature row ih
    of the (width-padded) BasicBlock output to the 10 logits."""
    w2 = np.asarray(f2_w, np.float32)                 # (19, 11, 17, 17)
    w3 = np.asarray(f3_w, np.float32)                 # (32, 1900)
    w4 = np.asarray(f4_w, np.float32)                 # (10, 32)
    a = (w4 @ w3).reshape(10, C2, 10, 10)             # (n, co, oh, ow), NCHW flatten
    m = np.zeros((26, 28, C1, 10), np.float32)        # (ih, iwp, ci, n)
    for kh in range(17):
        for kw in range(17):
            blk = np.einsum("ncxy,cd->xydn", a, w2[:, :, kh, kw])  # (oh, ow, ci, n)
            m[kh:kh + 10, kw + 1:kw + 11] += blk
    return np.transpose(m, (1, 2, 0, 3)).reshape(WPAD, NHEAD)


def _row_mask():
    """(ROWS, 1) 0/1: rows 26/27 of every image are forced to zero."""
    return (np.arange(ROWS) % RPI < 26).astype(np.float32).reshape(ROWS, 1)


def _head_mask():
    """(ROWS, 260): 1 where the lane's feature-row index equals r mod 28."""
    r = np.arange(ROWS) % RPI
    c = np.arange(NHEAD) // 10
    return (r[:, None] == c[None, :]).astype(np.float32)


def _lane_fold():
    """(260, 10): folds the 26 groups of 10 lanes down to 10 logits."""
    return np.tile(np.eye(10, dtype=np.float32), (26, 1))


def _image_sum():
    """(N_IMG, ROWS): per-image row-sum matrix (1 where r // 28 == image)."""
    r = np.arange(ROWS) // RPI
    return (np.arange(N_IMG)[:, None] == r[None, :]).astype(np.float32)


def _probe_roll_sign():
    """Pin down pltpu.roll's rotation convention once, so the in-kernel row
    shifts are direction-safe regardless of jax version (numpy convention:
    result[i] = x[i - shift] -> sign +1)."""
    def k(x_ref, o_ref):
        o_ref[...] = pltpu.roll(x_ref[...], 1, axis=0)

    x = jnp.broadcast_to(jnp.arange(8, dtype=jnp.float32)[:, None], (8, 128))
    y = pl.pallas_call(
        k, out_shape=jax.ShapeDtypeStruct((8, 128), jnp.float32))(x)
    v = float(y[1, 0])
    if v == 0.0:
        return 1
    if v == 2.0:
        return -1
    raise AssertionError(f"unexpected pltpu.roll behaviour: y[1,0]={v}")


def prepare(params):
    bn1s = np.asarray(params["bn1_g"]) / np.sqrt(np.asarray(params["bn1_v"]) + EPS)
    bn1t = np.asarray(params["bn1_b"]) - np.asarray(params["bn1_m"]) * bn1s
    bn2s = np.asarray(params["bn2_g"]) / np.sqrt(np.asarray(params["bn2_v"]) + EPS)
    bn2t = np.asarray(params["bn2_b"]) - np.asarray(params["bn2_m"]) * bn2s
    bf, f32 = jnp.bfloat16, jnp.float32
    prep = {
        "t0": jnp.asarray(_toeplitz_f0(params["f0_w"]), bf),
        "b0row": jnp.asarray(_chan_row(params["f0_b"]), f32),
        "rowmask": jnp.asarray(_row_mask(), f32),
        "t1": jnp.asarray(_toeplitz_3x3(params["f1_w1"]), bf),
        "s1row": jnp.asarray(_chan_row(bn1s), f32),
        "sh1row": jnp.asarray(_chan_row(bn1t), f32),
        "t2": jnp.asarray(_toeplitz_3x3(params["f1_w2"]), bf),
        "s2row": jnp.asarray(_chan_row(bn2s), f32),
        "sh2row": jnp.asarray(_chan_row(bn2t), f32),
        "mcat": jnp.asarray(_fold_head(params["f2_w"], params["f3_w"],
                                       params["f4_w"]), bf),
        "maskh": jnp.asarray(_head_mask(), f32),
        "ffold": jnp.asarray(_lane_fold(), bf),
        "ssum": jnp.asarray(_image_sum(), bf),
    }
    prep["roll_sign"] = _probe_roll_sign()
    return prep


_ORDER = ["t0", "b0row", "rowmask", "t1", "s1row", "sh1row",
          "t2", "s2row", "sh2row", "mcat", "maskh", "ffold", "ssum"]


def forward(prep, x):
    B = x.shape[0]
    x = x.reshape(B, 28, 28).astype(jnp.float32)
    pad = (-B) % N_IMG                       # pad batch to a multiple of N_IMG
    if pad:
        x = jnp.concatenate([x, jnp.zeros((pad, 28, 28), jnp.float32)], axis=0)
    bp = B + pad
    xslab = x.reshape(bp * 28, 28)           # lane-dense input slab

    def const_spec(a):
        z = (0,) * a.ndim
        return pl.BlockSpec(a.shape, lambda b, z=z: z)

    in_specs = [pl.BlockSpec((ROWS, 28), lambda b: (b, 0))]
    in_specs += [const_spec(prep[name]) for name in _ORDER]

    out = pl.pallas_call(
        functools.partial(_fused_kernel, prep["roll_sign"]),
        out_shape=jax.ShapeDtypeStruct((bp, 10), jnp.float32),
        grid=(bp // N_IMG,),
        in_specs=in_specs,
        out_specs=pl.BlockSpec((N_IMG, 10), lambda b: (b, 0)),
        compiler_params=pltpu.CompilerParams(
            dimension_semantics=("parallel",),
        ),
    )(xslab, *[prep[name] for name in _ORDER])
    return out[:B]


# ---------------------------------------------------------------------------
# Plain-JAX f32 reference (loose numerical check) and parameter init.
# ---------------------------------------------------------------------------
def reference_forward(params, x):
    B = x.shape[0]
    x = x.reshape(B, 1, 28, 28).astype(jnp.float32)
    dn = ("NCHW", "OIHW", "NCHW")

    def bn(z, g, b, m, v):
        s = g / jnp.sqrt(v + EPS)
        return z * s.reshape(1, -1, 1, 1) + (b - m * s).reshape(1, -1, 1, 1)

    y = jax.lax.conv_general_dilated(x, params["f0_w"], (1, 1), "VALID",
                                     dimension_numbers=dn)
    y = y + params["f0_b"].reshape(1, C1, 1, 1)
    idn = y
    z = jax.lax.conv_general_dilated(y, params["f1_w1"], (1, 1),
                                     ((1, 1), (1, 1)), dimension_numbers=dn)
    z = jnp.maximum(bn(z, params["bn1_g"], params["bn1_b"],
                       params["bn1_m"], params["bn1_v"]), 0.0)
    z = jax.lax.conv_general_dilated(z, params["f1_w2"], (1, 1),
                                     ((1, 1), (1, 1)), dimension_numbers=dn)
    z = bn(z, params["bn2_g"], params["bn2_b"], params["bn2_m"], params["bn2_v"])
    z = jnp.maximum(z + idn, 0.0)
    z = jax.lax.conv_general_dilated(z, params["f2_w"], (1, 1), "VALID",
                                     dimension_numbers=dn)
    z = z.reshape(B, 1900)
    z = z @ params["f3_w"].T
    z = z @ params["f4_w"].T
    return jax.nn.log_softmax(z, axis=1)


def init_params(key):
    ks = jax.random.split(key, 16)

    def n(k, shape, std):
        return jax.random.normal(k, shape, jnp.float32) * std

    p = {}
    p["f0_w"] = n(ks[0], (11, 1, 3, 3), 0.2)       # Conv2d(1, 11, 3x3), bias=True
    p["f0_b"] = n(ks[1], (11,), 0.1)
    p["f1_w1"] = n(ks[2], (11, 11, 3, 3), 0.1)     # BasicBlock conv1 (bias=False)
    p["f1_w2"] = n(ks[3], (11, 11, 3, 3), 0.1)     # BasicBlock conv2 (bias=False)
    p["bn1_g"] = 1.0 + 0.1 * n(ks[4], (11,), 1.0)  # BatchNorm2d(11) eval-mode params
    p["bn1_b"] = 0.1 * n(ks[5], (11,), 1.0)
    p["bn1_m"] = 0.05 * n(ks[6], (11,), 1.0)
    p["bn1_v"] = 1.0 + jnp.abs(0.1 * n(ks[7], (11,), 1.0))
    p["bn2_g"] = 1.0 + 0.1 * n(ks[8], (11,), 1.0)
    p["bn2_b"] = 0.1 * n(ks[9], (11,), 1.0)
    p["bn2_m"] = 0.05 * n(ks[10], (11,), 1.0)
    p["bn2_v"] = 1.0 + jnp.abs(0.1 * n(ks[11], (11,), 1.0))
    p["f2_w"] = n(ks[12], (19, 11, 17, 17), 0.02)  # Conv2d(11, 19, 17x17), bias=False
    p["f3_w"] = n(ks[13], (32, 1900), 0.02)        # Linear(1900, 32), bias=False
    p["f4_w"] = n(ks[14], (10, 32), 0.1)           # Linear(32, 10),  bias=False
    return p


if __name__ == "__main__":
    params = init_params(jax.random.PRNGKey(42))
    prep = prepare(params)

    x = jax.random.normal(jax.random.PRNGKey(0), (2, 1, 28, 28), jnp.float32)

    fwd = jax.jit(functools.partial(forward, prep))
    out = jax.block_until_ready(fwd(x))

    assert out.shape == (2, 10), out.shape
    assert bool(jnp.all(jnp.isfinite(out)))
    # LogSoftmax rows must exponentiate-sum to 1.
    assert bool(jnp.allclose(jnp.exp(out).sum(axis=1), 1.0, atol=1e-3))
    # Loose check vs an f32 plain-JAX reference (kernel uses bf16 matmul operands).
    ref = jax.block_until_ready(reference_forward(params, x))
    assert bool(jnp.allclose(out, ref, atol=0.25)), (out, ref)
    print("KERNEL_OK")
</pallas_src>

<mosaic_0001>
module attributes {stable_mosaic.version = 11 : i64} {
  func.func @k(%arg0: memref<8x128xf32, #tpu.memory_space<vmem>>, %arg1: memref<8x128xf32, #tpu.memory_space<vmem>>) attributes {dimension_semantics = [], scalar_prefetch = 0 : i64, scratch_operands = 0 : i64, tpu.core_type = #tpu.core_type<tc>} {
    %c0 = arith.constant 0 : index
    %c0_0 = arith.constant 0 : index
    %0 = vector.load %arg0[%c0, %c0_0] : memref<8x128xf32, #tpu.memory_space<vmem>>, vector<8x128xf32>
    %c1_i32 = arith.constant 1 : i32
    %1 = tpu.dynamic_rotate %0 by %c1_i32 dim 0 : vector<8x128xf32>, i32 -> vector<8x128xf32>
    %c0_1 = arith.constant 0 : index
    %c0_2 = arith.constant 0 : index
    %2 = vector.load %arg1[%c0_1, %c0_2] : memref<8x128xf32, #tpu.memory_space<vmem>>, vector<8x128xf32>
    tpu.vector_store %arg1[%c0_1, %c0_2], %1 {strides = array<i32>} : memref<8x128xf32, #tpu.memory_space<vmem>>, vector<8x128xf32>,
    return
  }
}

</mosaic_0001>

<llo_original>
// kernel: tpu_custom_call.1
$region0: #{tpu_custom_call.1}
  #allocation0 [shape = 'u32[]', space=smem, size = 0x4, offset = 0x4, fixed_abs, tag = 'smem constant byte address 0x4 - core index']
  #allocation1 [shape = 'u32[144,128]{1,0:T(1,128)}', space=vmem, size = 0x12000, scoped, tag = 'internal scratch']
  %s0 = inlined_call_operand.hbm [shape: f32[8,128], index: 0, kind: input, shape index: {}]
  %s1 = inlined_call_operand.hbm [shape: f32[8,128], index: 1, kind: output, shape index: {}]
  %s2 = sld [smem:[#allocation0]]
  $region18: #{tpu_custom_call.1} parent=0
    _
  %s4 = ssub.s32 1, %s2
  %s5 = scalar_select 0, %s4, %s2
  $region1: #{tpu_custom_call.1} parent=0
    #allocation2 [shape = 'u8[4096]{0}', space=vmem, size = 0x1000, scoped, tag = 'input window, operand 0, single buffered']
    #allocation3 [shape = 's32[1]{0}', space=sflag, size = 0x4, scoped, tag = 'scoped memory for tpu_custom_call.1']
    #allocation4 [shape = 's32[1]{0}', space=sflag, size = 0x4, scoped, tag = 'scoped memory for tpu_custom_call.1']
    #allocation5 [shape = 'u8[4096]{0}', space=vmem, size = 0x1000, scoped, tag = 'output window, operand 0, single buffered']
    %6 = vsyncpa [#allocation3], 0
    %7 = vsyncpa [#allocation4], 0
    // Predicated region
    $region2: #{tpu_custom_call.1} parent=1 // pred_check
      _
    $region3: #{tpu_custom_call.1} parent=1 // pred_check_branch
      %9 = sbr.rel (0) target = $region5
    $region4: #{tpu_custom_call.1} parent=1 // pred_region
      %s11 = ssub.s32 128, 128
      %12 = vsyncadd [#allocation3], %s11
      %s14 = sshll.u32 [#allocation2], 4
      %s15 = int_to_ptr.vmem [resolvable:$true] %s14
      %17 = dma.hbm_to_vmem [thread:$0]  %s0, 128, %s15, [#allocation3]
    $region5: #{tpu_custom_call.1} parent=1 // pred_fallthru
      _
    // Predicated region
    $region6: #{tpu_custom_call.1} parent=1 // pred_check
      _
    $region7: #{tpu_custom_call.1} parent=1 // pred_check_branch
      %19 = sbr.rel (0) target = $region9
    $region8: #{tpu_custom_call.1} parent=1 // pred_region
      %20 = dma.done [#allocation3], 128
    $region9: #{tpu_custom_call.1} parent=1 // pred_fallthru
      _
    %v21 = vld [vmem:[#allocation2] sm:$0xff]
    %v22 = vrot.slane %v21, 7
    %23 = vst [vmem:[#allocation5] sm:$0xff] %v22
    // Predicated region
    $region10: #{tpu_custom_call.1} parent=1 // pred_check
      _
    $region11: #{tpu_custom_call.1} parent=1 // pred_check_branch
      %25 = sbr.rel (0) target = $region13
    $region12: #{tpu_custom_call.1} parent=1 // pred_region
      %s27 = ssub.s32 128, 128
      %28 = vsyncadd [#allocation4], %s27
      %s30 = sshll.u32 [#allocation5], 4
      %s31 = int_to_ptr.vmem [resolvable:$true] %s30
      %33 = dma.vmem_to_hbm [thread:$0]  %s31, 128, %s1, [#allocation4]
    $region13: #{tpu_custom_call.1} parent=1 // pred_fallthru
      _
    // Predicated region
    $region14: #{tpu_custom_call.1} parent=1 // pred_check
      _
    $region15: #{tpu_custom_call.1} parent=1 // pred_check_branch
      %35 = sbr.rel (0) target = $region17
    $region16: #{tpu_custom_call.1} parent=1 // pred_region
      %36 = dma.done [#allocation4], 128
    $region17: #{tpu_custom_call.1} parent=1 // pred_fallthru
      _
    %37 = vsyncpa [#allocation3], 1
    %38 = vsyncpa [#allocation4], 1

</llo_original>
